<compile_context>
chip_gen: v5e
topology: v5e:2x2
jax: 0.10.0
libtpu: 0.0.40
codegen_flags: <defaults>
</compile_context>

<pallas_src>
import jax
import jax.numpy as jnp
from jax.experimental import pallas as pl
from jax.experimental.pallas import tpu as pltpu


# ---------------------------------------------------------------------------
# Fused kernel: FC+ReLU + all LSTM layers (zero-init, single step) in one call
# ---------------------------------------------------------------------------
def _fused_kernel(x0_ref, fcw_ref, fcb_ref, w_ref, b_ref, hn_ref, cn_ref):
    # x0:  (B, ninput) f32     fcw: (ninput, nembed) bf16    fcb: (1, nembed) f32
    # w:   (L, nin, 3H) bf16   lane-concatenated i|g|o gate weights (f-gate is dead)
    # b:   (L, 1, 3H)  f32
    # hn/cn: (L, B, H) f32 full-array output blocks (single writeback each)
    L, _, H = hn_ref.shape

    # FC + ReLU (bf16 matmul inputs, f32 accumulate; elementwise stays f32).
    y = jnp.dot(x0_ref[...].astype(jnp.bfloat16), fcw_ref[...],
                preferred_element_type=jnp.float32) + fcb_ref[...]
    x = jnp.maximum(y, 0.0).astype(jnp.bfloat16)          # (B, nembed) bf16 carry

    # Single LSTM step per layer with h0 = c0 = 0:
    #   gates = x @ Wih + b      (h0 @ Whh == 0 -> removed)
    #   c_new = i * g            (f-gate * c0 == 0 -> removed)
    # One lane-dense (B, 3H) matmul per layer; gate columns sliced from its result.
    for l in range(L):                                    # static unroll (L small, static)
        gates = jnp.dot(x, w_ref[l], preferred_element_type=jnp.float32) + b_ref[l]
        i_g = jax.nn.sigmoid(gates[:, 0 * H:1 * H])       # f32 elementwise (v5e-safe)
        g_g = jnp.tanh(gates[:, 1 * H:2 * H])
        o_g = jax.nn.sigmoid(gates[:, 2 * H:3 * H])
        c_new = i_g * g_g
        h_new = o_g * jnp.tanh(c_new)
        hn_ref[l] = h_new
        cn_ref[l] = c_new
        x = h_new.astype(jnp.bfloat16)                    # next layer input (eval: no dropout)


def _fused_call(x0, fc_w, fc_b, w_gates, b_gates):
    B, _ = x0.shape
    nembed = fc_w.shape[1]
    L, nin, G = w_gates.shape
    H = G // 3
    assert G == 3 * H
    assert nembed == nin, "fused path requires nembed == nhidden (layer-0 input width)"

    # No grid: everything fits comfortably in VMEM at these sizes; full-array VMEM
    # blocks avoid pipeline double-buffering and per-step overhead entirely.
    vmem = lambda: pl.BlockSpec(memory_space=pltpu.MemorySpace.VMEM)
    return pl.pallas_call(
        _fused_kernel,
        out_shape=(
            jax.ShapeDtypeStruct((L, B, H), jnp.float32),   # h_n
            jax.ShapeDtypeStruct((L, B, H), jnp.float32),   # c_n
        ),
        in_specs=[vmem() for _ in range(5)],
        out_specs=(vmem(), vmem()),
    )(x0, fc_w, fc_b, w_gates, b_gates)


@jax.jit
def img_encoder_structure_forward(packed, feat_im_with_seq_dim):
    """Matches Img_Encoder_Structure.forward (eval mode).

    Only valid for the module's actual usage pattern: a length-1 sequence
    (feat[0].unsqueeze(0)) with the default zero initial (h, c); the f-gate,
    Whh and c0 terms are dead under those conditions and have been eliminated.
    """
    assert feat_im_with_seq_dim.ndim == 3, "expects (seq, B, ninput)"
    x0 = feat_im_with_seq_dim[0]                            # (B, ninput)
    h_n, c_n = _fused_call(x0, packed["fc_w"], packed["fc_b"],
                           packed["w_gates"], packed["b_gates"])
    output = h_n[-1:]                                       # (1, B, H) == last layer's h
    return output, (h_n, c_n)


# ---------------------------------------------------------------------------
# Parameter init (PyTorch-style) and one-time kernel packing
# ---------------------------------------------------------------------------
def init_params(key, ninput, nembed, nhidden, nlayers):
    """Full PyTorch-style parameter set (used by the pure-JAX reference)."""
    params = {}
    k_fc_w, k_fc_b, key = jax.random.split(key, 3)
    bound_fc = 1.0 / jnp.sqrt(ninput)
    params["fc_w_t"] = jax.random.uniform(k_fc_w, (ninput, nembed),
                                          jnp.float32, -bound_fc, bound_fc)
    params["fc_b"] = jax.random.uniform(k_fc_b, (1, nembed),
                                        jnp.float32, -bound_fc, bound_fc)
    bound = 1.0 / jnp.sqrt(nhidden)
    layers = []
    for layer in range(nlayers):
        nin = nembed if layer == 0 else nhidden
        key, k1, k2, k3, k4 = jax.random.split(key, 5)
        wih_t = jax.random.uniform(k1, (nin, 4 * nhidden), jnp.float32, -bound, bound)
        whh_t = jax.random.uniform(k2, (nhidden, 4 * nhidden), jnp.float32, -bound, bound)
        b_ih = jax.random.uniform(k3, (1, 4 * nhidden), jnp.float32, -bound, bound)
        b_hh = jax.random.uniform(k4, (1, 4 * nhidden), jnp.float32, -bound, bound)
        layers.append({"wih_t": wih_t, "whh_t": whh_t, "b": b_ih + b_hh})
    params["lstm"] = layers
    return params


def pack_params(params):
    """One-time packing for the fused kernel.

    * Drops the dead Whh / f-gate weights (zero-init single step).
    * Lane-concatenates the surviving i|g|o gate weights into one (nin, 3H) matrix
      per layer -> a single lane-dense matmul per layer in the kernel.
      NOTE: gate_cols assumes torch.nn.LSTM's (i, f, g, o) gate ordering.
    * Casts matmul weights to bf16 (f32 accumulation happens in-kernel).
    """
    H = params["lstm"][0]["whh_t"].shape[0]
    gate_cols = (0, 2, 3)  # keep i, g, o of PyTorch's (i, f, g, o)
    w_list, b_list = [], []
    for lp in params["lstm"]:
        w_list.append(jnp.concatenate(
            [lp["wih_t"][:, k * H:(k + 1) * H] for k in gate_cols], axis=1))   # (nin, 3H)
        b_list.append(jnp.concatenate(
            [lp["b"][:, k * H:(k + 1) * H] for k in gate_cols], axis=1))       # (1, 3H)
    return {
        "fc_w": params["fc_w_t"].astype(jnp.bfloat16),          # (ninput, nembed) bf16
        "fc_b": params["fc_b"],                                  # (1, nembed) f32
        "w_gates": jnp.stack(w_list, 0).astype(jnp.bfloat16),    # (L, nin, 3H) bf16
        "b_gates": jnp.stack(b_list, 0),                         # (L, 1, 3H) f32
    }


# ---------------------------------------------------------------------------
# Pure-JAX reference (full LSTM cell with zero init, f32 weights)
# ---------------------------------------------------------------------------
def reference_forward(params, feat):
    x0 = feat[0]
    y = jnp.maximum(x0 @ params["fc_w_t"] + params["fc_b"], 0.0)
    B = y.shape[0]
    H = params["lstm"][0]["whh_t"].shape[0]
    h0 = jnp.zeros((B, H), jnp.float32)
    c0 = jnp.zeros((B, H), jnp.float32)
    layer_in = y
    hs, cs = [], []
    for lp in params["lstm"]:
        gates = layer_in @ lp["wih_t"] + h0 @ lp["whh_t"] + lp["b"]
        i = jax.nn.sigmoid(gates[:, 0:H])
        f = jax.nn.sigmoid(gates[:, H:2 * H])
        g = jnp.tanh(gates[:, 2 * H:3 * H])
        o = jax.nn.sigmoid(gates[:, 3 * H:4 * H])
        c = f * c0 + i * g
        h = o * jnp.tanh(c)
        hs.append(h)
        cs.append(c)
        layer_in = h
    return layer_in[None], (jnp.stack(hs), jnp.stack(cs))


if __name__ == "__main__":
    SEQ, BATCH = 8, 2
    NINPUT, NEMBED, NHIDDEN, NLAYERS = 32, 32, 32, 2

    key = jax.random.PRNGKey(0)
    k_data, k_params = jax.random.split(key)
    feat = jax.random.normal(k_data, (SEQ, BATCH, NINPUT), jnp.float32)
    params = init_params(k_params, NINPUT, NEMBED, NHIDDEN, NLAYERS)
    packed = pack_params(params)

    output, (h_n, c_n) = img_encoder_structure_forward(packed, feat)
    jax.block_until_ready((output, h_n, c_n))

    # sanity check against pure-JAX (f32 weights, full LSTM cell) reference
    ref_out, (ref_h, ref_c) = reference_forward(params, feat)
    assert output.shape == (1, BATCH, NHIDDEN)
    assert h_n.shape == (NLAYERS, BATCH, NHIDDEN)
    assert c_n.shape == (NLAYERS, BATCH, NHIDDEN)
    assert jnp.allclose(output, ref_out, atol=2e-2, rtol=2e-2)
    assert jnp.allclose(h_n, ref_h, atol=2e-2, rtol=2e-2)
    assert jnp.allclose(c_n, ref_c, atol=2e-2, rtol=2e-2)

    print("KERNEL_OK")
</pallas_src>

<mosaic_0001>
module attributes {stable_mosaic.version = 11 : i64} {
  func.func @_fused_kernel(%arg0: memref<2x32xf32, #tpu.memory_space<vmem>>, %arg1: memref<32x32xbf16, #tpu.memory_space<vmem>>, %arg2: memref<1x32xf32, #tpu.memory_space<vmem>>, %arg3: memref<2x32x96xbf16, #tpu.memory_space<vmem>>, %arg4: memref<2x1x96xf32, #tpu.memory_space<vmem>>, %arg5: memref<2x2x32xf32, #tpu.memory_space<vmem>>, %arg6: memref<2x2x32xf32, #tpu.memory_space<vmem>>) attributes {dimension_semantics = [], scalar_prefetch = 0 : i64, scratch_operands = 0 : i64, tpu.core_type = #tpu.core_type<tc>} {
    %c0 = arith.constant 0 : index
    %c0_0 = arith.constant 0 : index
    %0 = vector.load %arg0[%c0, %c0_0] : memref<2x32xf32, #tpu.memory_space<vmem>>, vector<2x32xf32>
    %1 = arith.truncf %0 : vector<2x32xf32> to vector<2x32xbf16>
    %c0_1 = arith.constant 0 : index
    %c0_2 = arith.constant 0 : index
    %2 = vector.load %arg1[%c0_1, %c0_2] : memref<32x32xbf16, #tpu.memory_space<vmem>>, vector<32x32xbf16>
    %cst = arith.constant dense<0.000000e+00> : vector<2x32xf32>
    %3 = tpu.matmul %1, %2, %cst {dimension_numbers = #tpu.dot_dimension_numbers<[1], [0], [0], [1], [0, 0, 1, 1], [], []>} : vector<2x32xbf16>, vector<32x32xbf16>, vector<2x32xf32> -> vector<2x32xf32>
    %c0_3 = arith.constant 0 : index
    %c0_4 = arith.constant 0 : index
    %4 = vector.load %arg2[%c0_3, %c0_4] : memref<1x32xf32, #tpu.memory_space<vmem>>, vector<1x32xf32>
    %5 = vector.broadcast %4 : vector<1x32xf32> to vector<2x32xf32>
    %6 = arith.addf %3, %5 : vector<2x32xf32>
    %cst_5 = arith.constant 0.000000e+00 : f32
    %7 = vector.broadcast %cst_5 : f32 to vector<2x32xf32>
    %8 = arith.maximumf %6, %7 : vector<2x32xf32>
    %9 = arith.truncf %8 : vector<2x32xf32> to vector<2x32xbf16>
    %c0_6 = arith.constant 0 : index
    %c0_7 = arith.constant 0 : index
    %c0_8 = arith.constant 0 : index
    %10 = vector.load %arg3[%c0_6, %c0_7, %c0_8] : memref<2x32x96xbf16, #tpu.memory_space<vmem>>, vector<1x32x96xbf16>
    %11 = vector.shape_cast %10 : vector<1x32x96xbf16> to vector<32x96xbf16>
    %cst_9 = arith.constant dense<0.000000e+00> : vector<2x96xf32>
    %12 = tpu.matmul %9, %11, %cst_9 {dimension_numbers = #tpu.dot_dimension_numbers<[1], [0], [0], [1], [0, 0, 1, 1], [], []>} : vector<2x32xbf16>, vector<32x96xbf16>, vector<2x96xf32> -> vector<2x96xf32>
    %c0_10 = arith.constant 0 : index
    %c0_11 = arith.constant 0 : index
    %c0_12 = arith.constant 0 : index
    %13 = vector.load %arg4[%c0_10, %c0_11, %c0_12] : memref<2x1x96xf32, #tpu.memory_space<vmem>>, vector<1x1x96xf32>
    %14 = vector.shape_cast %13 : vector<1x1x96xf32> to vector<1x96xf32>
    %15 = vector.broadcast %14 : vector<1x96xf32> to vector<2x96xf32>
    %16 = arith.addf %12, %15 : vector<2x96xf32>
    %17 = vector.extract_strided_slice %16 {offsets = [0, 0], sizes = [2, 32], strides = [1, 1]} : vector<2x96xf32> to vector<2x32xf32>
    %18 = arith.negf %17 : vector<2x32xf32>
    %19 = math.exp %18 : vector<2x32xf32>
    %cst_13 = arith.constant 1.000000e+00 : f32
    %20 = vector.broadcast %cst_13 : f32 to vector<2x32xf32>
    %21 = arith.addf %20, %19 : vector<2x32xf32>
    %22 = arith.divf %20, %21 : vector<2x32xf32>
    %23 = vector.extract_strided_slice %16 {offsets = [0, 32], sizes = [2, 32], strides = [1, 1]} : vector<2x96xf32> to vector<2x32xf32>
    %24 = math.tanh %23 : vector<2x32xf32>
    %25 = vector.extract_strided_slice %16 {offsets = [0, 64], sizes = [2, 32], strides = [1, 1]} : vector<2x96xf32> to vector<2x32xf32>
    %26 = arith.negf %25 : vector<2x32xf32>
    %27 = math.exp %26 : vector<2x32xf32>
    %cst_14 = arith.constant 1.000000e+00 : f32
    %28 = vector.broadcast %cst_14 : f32 to vector<2x32xf32>
    %29 = arith.addf %28, %27 : vector<2x32xf32>
    %30 = arith.divf %28, %29 : vector<2x32xf32>
    %31 = arith.mulf %22, %24 : vector<2x32xf32>
    %32 = math.tanh %31 : vector<2x32xf32>
    %33 = arith.mulf %30, %32 : vector<2x32xf32>
    %c0_15 = arith.constant 0 : index
    %c0_16 = arith.constant 0 : index
    %c0_17 = arith.constant 0 : index
    %34 = vector.load %arg5[%c0_15, %c0_16, %c0_17] : memref<2x2x32xf32, #tpu.memory_space<vmem>>, vector<1x2x32xf32>
    %35 = vector.shape_cast %34 : vector<1x2x32xf32> to vector<2x32xf32>
    %36 = vector.shape_cast %33 : vector<2x32xf32> to vector<1x2x32xf32>
    tpu.vector_store %arg5[%c0_15, %c0_16, %c0_17], %36 {strides = array<i32>} : memref<2x2x32xf32, #tpu.memory_space<vmem>>, vector<1x2x32xf32>,
    %c0_18 = arith.constant 0 : index
    %c0_19 = arith.constant 0 : index
    %c0_20 = arith.constant 0 : index
    %37 = vector.load %arg6[%c0_18, %c0_19, %c0_20] : memref<2x2x32xf32, #tpu.memory_space<vmem>>, vector<1x2x32xf32>
    %38 = vector.shape_cast %37 : vector<1x2x32xf32> to vector<2x32xf32>
    %39 = vector.shape_cast %31 : vector<2x32xf32> to vector<1x2x32xf32>
    tpu.vector_store %arg6[%c0_18, %c0_19, %c0_20], %39 {strides = array<i32>} : memref<2x2x32xf32, #tpu.memory_space<vmem>>, vector<1x2x32xf32>,
    %40 = arith.truncf %33 : vector<2x32xf32> to vector<2x32xbf16>
    %c1 = arith.constant 1 : index
    %c0_21 = arith.constant 0 : index
    %c0_22 = arith.constant 0 : index
    %41 = vector.load %arg3[%c1, %c0_21, %c0_22] : memref<2x32x96xbf16, #tpu.memory_space<vmem>>, vector<1x32x96xbf16>
    %42 = vector.shape_cast %41 : vector<1x32x96xbf16> to vector<32x96xbf16>
    %cst_23 = arith.constant dense<0.000000e+00> : vector<2x96xf32>
    %43 = tpu.matmul %40, %42, %cst_23 {dimension_numbers = #tpu.dot_dimension_numbers<[1], [0], [0], [1], [0, 0, 1, 1], [], []>} : vector<2x32xbf16>, vector<32x96xbf16>, vector<2x96xf32> -> vector<2x96xf32>
    %c1_24 = arith.constant 1 : index
    %c0_25 = arith.constant 0 : index
    %c0_26 = arith.constant 0 : index
    %44 = vector.load %arg4[%c1_24, %c0_25, %c0_26] : memref<2x1x96xf32, #tpu.memory_space<vmem>>, vector<1x1x96xf32>
    %45 = vector.shape_cast %44 : vector<1x1x96xf32> to vector<1x96xf32>
    %46 = vector.broadcast %45 : vector<1x96xf32> to vector<2x96xf32>
    %47 = arith.addf %43, %46 : vector<2x96xf32>
    %48 = vector.extract_strided_slice %47 {offsets = [0, 0], sizes = [2, 32], strides = [1, 1]} : vector<2x96xf32> to vector<2x32xf32>
    %49 = arith.negf %48 : vector<2x32xf32>
    %50 = math.exp %49 : vector<2x32xf32>
    %cst_27 = arith.constant 1.000000e+00 : f32
    %51 = vector.broadcast %cst_27 : f32 to vector<2x32xf32>
    %52 = arith.addf %51, %50 : vector<2x32xf32>
    %53 = arith.divf %51, %52 : vector<2x32xf32>
    %54 = vector.extract_strided_slice %47 {offsets = [0, 32], sizes = [2, 32], strides = [1, 1]} : vector<2x96xf32> to vector<2x32xf32>
    %55 = math.tanh %54 : vector<2x32xf32>
    %56 = vector.extract_strided_slice %47 {offsets = [0, 64], sizes = [2, 32], strides = [1, 1]} : vector<2x96xf32> to vector<2x32xf32>
    %57 = arith.negf %56 : vector<2x32xf32>
    %58 = math.exp %57 : vector<2x32xf32>
    %cst_28 = arith.constant 1.000000e+00 : f32
    %59 = vector.broadcast %cst_28 : f32 to vector<2x32xf32>
    %60 = arith.addf %59, %58 : vector<2x32xf32>
    %61 = arith.divf %59, %60 : vector<2x32xf32>
    %62 = arith.mulf %53, %55 : vector<2x32xf32>
    %63 = math.tanh %62 : vector<2x32xf32>
    %64 = arith.mulf %61, %63 : vector<2x32xf32>
    %c1_29 = arith.constant 1 : index
    %c0_30 = arith.constant 0 : index
    %c0_31 = arith.constant 0 : index
    %65 = vector.load %arg5[%c1_29, %c0_30, %c0_31] : memref<2x2x32xf32, #tpu.memory_space<vmem>>, vector<1x2x32xf32>
    %66 = vector.shape_cast %65 : vector<1x2x32xf32> to vector<2x32xf32>
    %67 = vector.shape_cast %64 : vector<2x32xf32> to vector<1x2x32xf32>
    tpu.vector_store %arg5[%c1_29, %c0_30, %c0_31], %67 {strides = array<i32>} : memref<2x2x32xf32, #tpu.memory_space<vmem>>, vector<1x2x32xf32>,
    %c1_32 = arith.constant 1 : index
    %c0_33 = arith.constant 0 : index
    %c0_34 = arith.constant 0 : index
    %68 = vector.load %arg6[%c1_32, %c0_33, %c0_34] : memref<2x2x32xf32, #tpu.memory_space<vmem>>, vector<1x2x32xf32>
    %69 = vector.shape_cast %68 : vector<1x2x32xf32> to vector<2x32xf32>
    %70 = vector.shape_cast %62 : vector<2x32xf32> to vector<1x2x32xf32>
    tpu.vector_store %arg6[%c1_32, %c0_33, %c0_34], %70 {strides = array<i32>} : memref<2x2x32xf32, #tpu.memory_space<vmem>>, vector<1x2x32xf32>,
    return
  }
}

</mosaic_0001>

<llo_original>
// kernel: img_encoder_structure_forward.1
$region0: #{img_encoder_structure_forward.1}
  #allocation0 [shape = 'u32[]', space=smem, size = 0x4, offset = 0x4, fixed_abs, tag = 'smem constant byte address 0x4 - core index']
  #allocation1 [shape = 'u32[72,128]{1,0:T(1,128)}', space=vmem, size = 0x9000, scoped, tag = 'internal scratch']
  %s0 = inlined_call_operand.vmem [shape: f32[2,32], index: 0, kind: input, shape index: {}]
  %s1 = inlined_call_operand.hbm [shape: bf16[32,32], index: 1, kind: input, shape index: {}]
  %s2 = inlined_call_operand.vmem [shape: f32[1,32], index: 2, kind: input, shape index: {}]
  %s3 = inlined_call_operand.hbm [shape: bf16[2,32,96], index: 3, kind: input, shape index: {}]
  %s4 = inlined_call_operand.vmem [shape: f32[2,1,96], index: 4, kind: input, shape index: {}]
  %s5 = inlined_call_operand.vmem [shape: f32[2,2,32], index: 5, kind: output, shape index: {0}]
  %s6 = inlined_call_operand.hbm [shape: f32[2,2,32], index: 6, kind: output, shape index: {1}]
  %7 = xla_tuple %s5, %s6
  %s8 = sld [smem:[#allocation0]]
  $region46: #{img_encoder_structure_forward.1} parent=0
    _
  %s10 = ssub.s32 1, %s8
  %s11 = scalar_select 0, %s10, %s8
  $region1: #{img_encoder_structure_forward.1} parent=0
    #allocation2 [shape = 'u8[8192]{0}', space=vmem, size = 0x2000, scoped, tag = 'input window, operand 1, single buffered']
    #allocation3 [shape = 's32[1]{0}', space=sflag, size = 0x4, scoped, tag = 'scoped memory for img_encoder_structure_forward.1']
    #allocation4 [shape = 's32[1]{0}', space=sflag, size = 0x4, scoped, tag = 'scoped memory for img_encoder_structure_forward.1']
    #allocation5 [shape = 'u8[16384]{0}', space=vmem, size = 0x4000, scoped, tag = 'input window, operand 3, single buffered']
    #allocation6 [shape = 's32[1]{0}', space=sflag, size = 0x4, scoped, tag = 'scoped memory for img_encoder_structure_forward.1']
    #allocation7 [shape = 'u8[2048]{0}', space=vmem, size = 0x800, scoped, tag = 'output window, operand 1, single buffered']
    %12 = vsyncpa [#allocation3], 0
    %13 = vsyncpa [#allocation6], 0
    %14 = vsyncpa [#allocation4], 0
    // Predicated region
    $region2: #{img_encoder_structure_forward.1} parent=1 // pred_check
      _
    $region3: #{img_encoder_structure_forward.1} parent=1 // pred_check_branch
      %16 = sbr.rel (0) target = $region5
    $region4: #{img_encoder_structure_forward.1} parent=1 // pred_region
      _
    $region5: #{img_encoder_structure_forward.1} parent=1 // pred_fallthru
      _
    // Predicated region
    $region6: #{img_encoder_structure_forward.1} parent=1 // pred_check
      _
    $region7: #{img_encoder_structure_forward.1} parent=1 // pred_check_branch
      %18 = sbr.rel (0) target = $region9
    $region8: #{img_encoder_structure_forward.1} parent=1 // pred_region
      %20 = vsyncadd [#allocation3], 0
      %s21 = sshll.u32 %s1, 4
      %s22 = int_to_ptr.hbm [resolvable:$true] %s21
      %s23 = sshll.u32 [#allocation2], 4
      %s24 = int_to_ptr.vmem [resolvable:$true] %s23
      %29 = dma.hbm_to_vmem [thread:$0]  %s22, 256, %s24, [#allocation3], 64, 64, 4
    $region9: #{img_encoder_structure_forward.1} parent=1 // pred_fallthru
      _
    // Predicated region
    $region10: #{img_encoder_structure_forward.1} parent=1 // pred_check
      _
    $region11: #{img_encoder_structure_forward.1} parent=1 // pred_check_branch
      %31 = sbr.rel (0) target = $region13
    $region12: #{img_encoder_structure_forward.1} parent=1 // pred_region
      _
    $region13: #{img_encoder_structure_forward.1} parent=1 // pred_fallthru
      _
    // Predicated region
    $region14: #{img_encoder_structure_forward.1} parent=1 // pred_check
      _
    $region15: #{img_encoder_structure_forward.1} parent=1 // pred_check_branch
      %33 = sbr.rel (0) target = $region17
    $region16: #{img_encoder_structure_forward.1} parent=1 // pred_region
      %35 = vsyncadd [#allocation6], 0
      %s36 = sshll.u32 %s3, 4
      %s37 = int_to_ptr.hbm [resolvable:$true] %s36
      %s38 = sshll.u32 [#allocation5], 4
      %s39 = int_to_ptr.vmem [resolvable:$true] %s38
      %44 = dma.hbm_to_vmem [thread:$0]  %s37, 512, %s39, [#allocation6], 64, 64, 4
    $region17: #{img_encoder_structure_forward.1} parent=1 // pred_fallthru
      _
    // Predicated region
    $region18: #{img_encoder_structure_forward.1} parent=1 // pred_check
      _
    $region19: #{img_encoder_structure_forward.1} parent=1 // pred_check_branch
      %46 = sbr.rel (0) target = $region21
    $region20: #{img_encoder_structure_forward.1} parent=1 // pred_region
      _
    $region21: #{img_encoder_structure_forward.1} parent=1 // pred_fallthru
      _
    // Predicated region
    $region22: #{img_encoder_structure_forward.1} parent=1 // pred_check
      _
    $region23: #{img_encoder_structure_forward.1} parent=1 // pred_check_branch
      %48 = sbr.rel (0) target = $region25
    $region24: #{img_encoder_structure_forward.1} parent=1 // pred_region
      %50 = dma.done [#allocation3], 256
    $region25: #{img_encoder_structure_forward.1} parent=1 // pred_fallthru
      _
    // Predicated region
    $region26: #{img_encoder_structure_forward.1} parent=1 // pred_check
      _
    $region27: #{img_encoder_structure_forward.1} parent=1 // pred_check_branch
      %52 = sbr.rel (0) target = $region29
    $region28: #{img_encoder_structure_forward.1} parent=1 // pred_region
      %54 = dma.done [#allocation6], 512
    $region29: #{img_encoder_structure_forward.1} parent=1 // pred_fallthru
      _
    %v56 = vld [vmem:[%s0] sm:$0x3]
    %v57 = vpack.c.bf16 %v56, %v56
    %v58 = vld [vmem:[#allocation2] sm:$0xf]
    %v59 = vld [vmem:[#allocation2 + $0x4] sm:$0xf]
    %v60 = vld [vmem:[#allocation2 + $0x8] sm:$0xf]
    %v61 = vld [vmem:[#allocation2 + $0xc] sm:$0xf]
    %v62 = vld [vmem:[%s2] sm:$0x1]
    %v64 = vperm.slane %v62, 0
    %v70 = vunpack.c.l.b16 %v58
    %v71 = vunpack.c.l.b16 %v59
    %v72 = vunpack.c.l.b16 %v60
    %v73 = vunpack.c.l.b16 %v61
    %v74 = vpack.c.b16 %v71, %v70
    %v75 = vpack.c.b16 %v73, %v72
    %vm78 = vcmask 261120
    %v80 = vsel %vm78, %v57, 0
    %82 = vmatpush.bf16.msra.mxu0 0
    %83 = vmatpush.bf16.msra.mxu0 0
    %84 = vmatpush.bf16.msra.mxu0 0
    %85 = vmatpush.bf16.msra.mxu0 0
    %86 = vmatpush.bf16.msra.mxu0 0
    %87 = vmatpush.bf16.msra.mxu0 0
    %88 = vmatpush.bf16.msra.mxu0 %v75
    %89 = vmatpush.bf16.msra.mxu0 %v74
    %90 = vmatmul.bf16.gmra.mxu0 %v80
    %v91 = vpop.f32.mrf.mxu0
    %v92 = vadd.f32 %v64, %v91
    %v93 = vpop.f32.mrf.mxu0
    %94 = vdwg.mxu0
    %v95 = vmax.f32 %v92, 0.0
    %v96 = vpack.c.bf16 %v95, %v95
    %v97 = vld [vmem:[#allocation5] sm:$0xf]
    %v98 = vld [vmem:[#allocation5 + $0x4] sm:$0xf]
    %v99 = vld [vmem:[#allocation5 + $0x8] sm:$0xf]
    %v100 = vld [vmem:[#allocation5 + $0xc] sm:$0xf]
    %v101 = vld [vmem:[%s4] sm:$0x1]
    %v103 = vperm.slane %v101, 0
    %v109 = vunpack.c.l.b16 %v97
    %v110 = vunpack.c.l.b16 %v98
    %v111 = vunpack.c.l.b16 %v99
    %v112 = vunpack.c.l.b16 %v100
    %v113 = vpack.c.b16 %v110, %v109
    %v114 = vpack.c.b16 %v112, %v111
    %v118 = vsel %vm78, %v96, 0
    %120 = vmatpush.bf16.msra.mxu0 0
    %121 = vmatpush.bf16.msra.mxu0 0
    %122 = vmatpush.bf16.msra.mxu0 0
    %123 = vmatpush.bf16.msra.mxu0 0
    %124 = vmatpush.bf16.msra.mxu0 0
    %125 = vmatpush.bf16.msra.mxu0 0
    %126 = vmatpush.bf16.msra.mxu0 %v114
    %127 = vmatpush.bf16.msra.mxu0 %v113
    %128 = vmatmul.bf16.gmra.mxu0 %v118
    %v129 = vpop.f32.mrf.mxu0
    %v130 = vadd.f32 %v103, %v129
    %v131 = vpop.f32.mrf.mxu0
    %132 = vdwg.mxu0
    %v133 = vxor.u32 %v130, 2147483648
    %v134 = vmul.f32 %v133, 1.442695
    %v135 = vpow.pop %v134
    %v136 = vadd.f32 %v135, 1.0
    %v137 = vrcp.pop %v136
    %v138 = vmul.f32 %v136, %v137
    %v139 = vsub.f32 1.0, %v138
    %v140 = vmul.f32 %v137, %v139
    %v141 = vadd.f32 %v137, %v140
    %vm142 = vweird.f32 %v136
    %vm143 = vweird.f32 %v137
    %vm144 = vmor %vm142, %vm143
    %v145 = vsel %vm144, %v137, %v141
    %v146 = vand.u32 2147483647, %v136
    %vm147 = vcmp.eq.f32.partialorder %v146, 8.507059e+37
    %v148 = vand.u32 %v136, 2147483648
    %v149 = vor.u32 1.1754944e-38, %v148
    %v150 = vsel %vm147, %v149, %v145
    %v151 = vmul.f32 1.0, %v150
    %v152 = vtanh.pop %v130
    %154 = vrot.lane.b32.xlu0 %v152, 96
    %v155 = vpop.permute.xlu0 %154
    %v157 = vmul.f32 %v151, %v155
    %v158 = vtanh.pop %v157
    %160 = vrot.lane.b32.xlu0 %v158, 64
    %v161 = vpop.permute.xlu0 %160
    %v163 = vmul.f32 %v151, %v161
    %165 = vrot.lane.b32.xlu0 %v163, 64
    %v166 = vpop.permute.xlu0 %165
    %vm168 = vcmask 254976
    %169 = vst.msk [vmem:[%s5] sm:$0x3] %vm168, %v166
    %170 = vst.msk [vmem:[#allocation7] sm:$0x3] %vm168, %v157
    %v171 = vpack.c.bf16 %v163, %v163
    %s172 = scalar_lea.vmem [#allocation5], 16
    %v173 = vld [vmem:[%s172] sm:$0xf]
    %v174 = vld [vmem:[%s172 + $0x4] sm:$0xf]
    %v175 = vld [vmem:[%s172 + $0x8] sm:$0xf]
    %v176 = vld [vmem:[%s172 + $0xc] sm:$0xf]
    %s177 = scalar_lea.vmem %s4, 1
    %v178 = vld [vmem:[%s177] sm:$0x1]
    %v180 = vperm.slane %v178, 0
    %183 = vrot.lane.b32.xlu0 %v171, 64
    %v184 = vpop.permute.xlu0 %183
    %v189 = vunpack.c.l.b16 %v173
    %v190 = vunpack.c.l.b16 %v174
    %v191 = vunpack.c.l.b16 %v175
    %v192 = vunpack.c.l.b16 %v176
    %v193 = vpack.c.b16 %v190, %v189
    %v194 = vpack.c.b16 %v192, %v191
    %v198 = vsel %vm78, %v184, 0
    %200 = vmatpush.bf16.msra.mxu0 0
    %201 = vmatpush.bf16.msra.mxu0 0
    %202 = vmatpush.bf16.msra.mxu0 0
    %203 = vmatpush.bf16.msra.mxu0 0
    %204 = vmatpush.bf16.msra.mxu0 0
    %205 = vmatpush.bf16.msra.mxu0 0
    %206 = vmatpush.bf16.msra.mxu0 %v194
    %207 = vmatpush.bf16.msra.mxu0 %v193
    %208 = vmatmul.bf16.gmra.mxu0 %v198
    %v209 = vpop.f32.mrf.mxu0
    %v210 = vadd.f32 %v180, %v209
    %v211 = vpop.f32.mrf.mxu0
    %212 = vdwg.mxu0
    %v213 = vxor.u32 %v210, 2147483648
    %v214 = vmul.f32 %v213, 1.442695
    %v215 = vpow.pop %v214
    %v216 = vadd.f32 %v215, 1.0
    %v217 = vrcp.pop %v216
    %v218 = vmul.f32 %v216, %v217
    %v219 = vsub.f32 1.0, %v218
    %v220 = vmul.f32 %v217, %v219
    %v221 = vadd.f32 %v217, %v220
    %vm222 = vweird.f32 %v216
    %vm223 = vweird.f32 %v217
    %vm224 = vmor %vm222, %vm223
    %v225 = vsel %vm224, %v217, %v221
    %v226 = vand.u32 2147483647, %v216
    %vm227 = vcmp.eq.f32.partialorder %v226, 8.507059e+37
    %v228 = vand.u32 %v216, 2147483648
    %v229 = vor.u32 1.1754944e-38, %v228
    %v230 = vsel %vm227, %v229, %v225
    %v231 = vmul.f32 1.0, %v230
    %v232 = vtanh.pop %v210
    %234 = vrot.lane.b32.xlu0 %v232, 96
    %v235 = vpop.permute.xlu0 %234
    %v237 = vmul.f32 %v231, %v235
    %v238 = vtanh.pop %v237
    %240 = vrot.lane.b32.xlu0 %v238, 64
    %v241 = vpop.permute.xlu0 %240
    %v243 = vmul.f32 %v231, %v241
    %245 = vrot.lane.b32.xlu0 %v243, 64
    %v246 = vpop.permute.xlu0 %245
    %s248 = scalar_lea.vmem %s5, 2
    %249 = vst.msk [vmem:[%s248] sm:$0x3] %vm168, %v246
    %s250 = scalar_lea.vmem [#allocation7], 2
    %251 = vst.msk [vmem:[%s250] sm:$0x3] %vm168, %v237
    // Predicated region
    $region30: #{img_encoder_structure_forward.1} parent=1 // pred_check
      _
    $region31: #{img_encoder_structure_forward.1} parent=1 // pred_check_branch
      %253 = sbr.rel (0) target = $region33
    $region32: #{img_encoder_structure_forward.1} parent=1 // pred_region
      _
    $region33: #{img_encoder_structure_forward.1} parent=1 // pred_fallthru
      _
    // Predicated region
    $region34: #{img_encoder_structure_forward.1} parent=1 // pred_check
      _
    $region35: #{img_encoder_structure_forward.1} parent=1 // pred_check_branch
      %255 = sbr.rel (0) target = $region37
    $region36: #{img_encoder_structure_forward.1} parent=1 // pred_region
      %257 = vsyncadd [#allocation4], 0
      %s258 = sshll.u32 [#allocation7], 4
      %s259 = int_to_ptr.vmem [resolvable:$true] %s258
      %s260 = sshll.u32 %s6, 4
      %s261 = int_to_ptr.hbm [resolvable:$true] %s260
      %266 = dma.vmem_to_hbm [thread:$0]  %s259, 64, %s261, [#allocation4], 32, 32, 2
    $region37: #{img_encoder_structure_forward.1} parent=1 // pred_fallthru
      _
    // Predicated region
    $region38: #{img_encoder_structure_forward.1} parent=1 // pred_check
      _
    $region39: #{img_encoder_structure_forward.1} parent=1 // pred_check_branch
      %268 = sbr.rel (0) target = $region41
    $region40: #{img_encoder_structure_forward.1} parent=1 // pred_region
      _
    $region41: #{img_encoder_structure_forward.1} parent=1 // pred_fallthru
      _
    // Predicated region
    $region42: #{img_encoder_structure_forward.1} parent=1 // pred_check
      _
    $region43: #{img_encoder_structure_forward.1} parent=1 // pred_check_branch
      %270 = sbr.rel (0) target = $region45
    $region44: #{img_encoder_structure_forward.1} parent=1 // pred_region
      %272 = dma.done [#allocation4], 64
    $region45: #{img_encoder_structure_forward.1} parent=1 // pred_fallthru
      _
    %273 = vsyncpa [#allocation3], 1
    %274 = vsyncpa [#allocation6], 1
    %275 = vsyncpa [#allocation4], 1

</llo_original>
